<compile_context>
chip_gen: v7x
topology: tpu7x:2x2x1
jax: 0.10.0
libtpu: 0.0.40
codegen_flags: <defaults>
</compile_context>

<pallas_src>
import functools

import jax
import jax.numpy as jnp
from jax.experimental import pallas as pl
from jax.experimental.pallas import tpu as pltpu


_MASK_VALUE = -0.7 * float(jnp.finfo(jnp.float32).max)


def _mha_flash_kernel(q_ref, k_ref, v_ref, wp_ref, bp_ref, out_ref,
                      m_sc, l_sc, acc_sc, attn_sc, *, is_causal):
    """One grid step = (batch b, query tile qi, key/value tile kv), all heads."""
    qi = pl.program_id(1)
    kv = pl.program_id(2)
    nkv = pl.num_programs(2)

    _, H, tq, dh = q_ref.shape     # q_ref: (1, H, tq, dh) bf16, pre-scaled
    tk = k_ref.shape[2]
    cdt = q_ref.dtype              # MXU operand dtype (bf16)

    # Reset the online-softmax state at the start of each (b, qi) block.
    @pl.when(kv == 0)
    def _init():
        m_sc[...] = jnp.full_like(m_sc, -jnp.inf)
        l_sc[...] = jnp.zeros_like(l_sc)
        acc_sc[...] = jnp.zeros_like(acc_sc)

    def _attend():
        # Scores for all heads at once: (H, tq, tk), f32 accumulation.
        s = jnp.einsum('htd,hkd->htk', q_ref[0], k_ref[0],
                       preferred_element_type=jnp.float32)
        if is_causal:
            # Mask only matters for diagonal-straddling tiles; fully-masked
            # tiles are skipped by the pl.when below.
            rows = qi * tq + jax.lax.broadcasted_iota(jnp.int32, (1, tq, tk), 1)
            cols = kv * tk + jax.lax.broadcasted_iota(jnp.int32, (1, tq, tk), 2)
            s = jnp.where(cols <= rows, s, _MASK_VALUE)

        m_prev = m_sc[...]
        m_new = jnp.maximum(m_prev, jnp.max(s, axis=-1, keepdims=True))
        alpha = jnp.exp(m_prev - m_new)
        p = jnp.exp(s - m_new)
        l_sc[...] = alpha * l_sc[...] + jnp.sum(p, axis=-1, keepdims=True)
        acc_sc[...] = alpha * acc_sc[...] + jnp.einsum(
            'htk,hkd->htd', p.astype(cdt), v_ref[0],
            preferred_element_type=jnp.float32)
        m_sc[...] = m_new

    if is_causal:
        # Skip KV tiles that are entirely above the causal diagonal.
        pl.when(kv * tk <= qi * tq + tq - 1)(_attend)
    else:
        _attend()

    # Last KV tile: normalize (EUP reciprocal), join heads into a (tq, Dh)
    # bf16 scratch with static lane slices, and do the output projection as
    # ONE (tq, Dh) @ (Dh, E) GEMM.  Runs for every q tile (outside the skip).
    @pl.when(kv == nkv - 1)
    def _finalize():
        inv_l = pl.reciprocal(l_sc[...], approx=True)          # (H, tq, 1)
        for h in range(H):                                     # static unroll
            attn_sc[:, h * dh:(h + 1) * dh] = (acc_sc[h] * inv_l[h]).astype(cdt)
        out_ref[0] = (jnp.dot(attn_sc[...], wp_ref[...],
                              preferred_element_type=jnp.float32)
                      + bp_ref[...]).astype(out_ref.dtype)


def _pick_tile(s, preferred):
    """Largest multiple-of-8 tile <= preferred that divides s (or s itself)."""
    if s <= preferred:
        return s
    t = (min(preferred, s) // 8) * 8
    while t > 8 and s % t != 0:
        t -= 8
    return t if (t > 0 and s % t == 0) else s


def _vmem_limit_bytes():
    # ~3/4 of physical VMEM: ~48 MiB on v7x (64 MiB physical), capped at
    # 100 MiB on v5e/v6e (128 MiB physical).  Leaves headroom for compiler
    # scratch and double-buffering.
    try:
        cap = pltpu.get_tpu_info().vmem_capacity_bytes
    except Exception:
        return 48 * 1024 * 1024
    return int(min(100 * 1024 * 1024, (cap * 3) // 4))


def multi_head_attention(xq, xk, xv, params, *, n_heads, is_causal=False,
                         compute_dtype=jnp.bfloat16, q_tile=512, kv_tile=256):
    B, S, E = xq.shape
    Dh = params['wq'].shape[1]
    assert Dh % n_heads == 0
    H = n_heads
    dh = Dh // H
    scale = float(dh) ** -0.5      # F.scaled_dot_product_attention default

    cdt = compute_dtype
    f32 = jnp.float32

    # One-time Q/K/V projections as plain XLA GEMMs (full-width MXU tiles),
    # emitted head-major (B, H, S, dh) in the compute dtype.  Scale is folded
    # into Q here, once, outside the kernel.
    def project(x, w, b):
        y = jnp.dot(x, w, preferred_element_type=f32) + b          # (B, S, Dh)
        return y.reshape(B, S, H, dh).transpose(0, 2, 1, 3)        # (B, H, S, dh)

    q = (project(xq, params['wq'], params['bq']) * scale).astype(cdt)
    k = project(xk, params['wk'], params['bk']).astype(cdt)
    v = project(xv, params['wv'], params['bv']).astype(cdt)

    wp = params['wp'].astype(cdt)                                   # (Dh, E)
    bp = params['bp'].reshape(1, E).astype(f32)                     # (1, E)

    # Keep tq large even on v5e (K/V re-stream traffic scales with S/tq);
    # tk moderate to bound per-step exp volume on the single EUP.
    tq = _pick_tile(S, q_tile)
    tk = _pick_tile(S, kv_tile)
    n_q = S // tq
    n_kv = S // tk

    kernel = functools.partial(_mha_flash_kernel, is_causal=is_causal)

    q_spec = pl.BlockSpec((1, H, tq, dh), lambda b, qi, kv: (b, 0, qi, 0))
    kv_spec = pl.BlockSpec((1, H, tk, dh), lambda b, qi, kv: (b, 0, kv, 0))
    wp_spec = pl.BlockSpec((Dh, E), lambda b, qi, kv: (0, 0))   # weights resident
    bp_spec = pl.BlockSpec((1, E), lambda b, qi, kv: (0, 0))
    out_spec = pl.BlockSpec((1, tq, E), lambda b, qi, kv: (b, qi, 0))

    return pl.pallas_call(
        kernel,
        out_shape=jax.ShapeDtypeStruct((B, S, E), xq.dtype),
        grid_spec=pltpu.PrefetchScalarGridSpec(
            num_scalar_prefetch=0,
            grid=(B, n_q, n_kv),
            in_specs=[q_spec, kv_spec, kv_spec, wp_spec, bp_spec],
            out_specs=out_spec,
            scratch_shapes=[
                pltpu.VMEM((H, tq, 1), f32),    # running max (all heads)
                pltpu.VMEM((H, tq, 1), f32),    # running softmax denominator
                pltpu.VMEM((H, tq, dh), f32),   # unnormalized attention accumulator
                pltpu.VMEM((tq, Dh), cdt),      # joined heads for the batched out-proj
            ]),
        compiler_params=pltpu.CompilerParams(
            dimension_semantics=("parallel", "parallel", "arbitrary"),
            vmem_limit_bytes=_vmem_limit_bytes()),
    )(q, k, v, wp, bp)


def _reference(xq, xk, xv, params, *, n_heads, is_causal=False):
    # Plain-JAX (f32) reference of the PyTorch forward (use_flash path).
    def lin(x, w, b):
        return x @ w + b

    def split(x):
        B, S, Dh = x.shape
        return x.reshape(B, S, n_heads, Dh // n_heads).transpose(0, 2, 1, 3)

    q = split(lin(xq, params['wq'], params['bq']))
    k = split(lin(xk, params['wk'], params['bk']))
    v = split(lin(xv, params['wv'], params['bv']))
    dh = q.shape[-1]
    s = jnp.einsum('bhqd,bhkd->bhqk', q, k) * (dh ** -0.5)
    if is_causal:
        S = s.shape[-1]
        mask = jnp.tril(jnp.ones((S, S), bool))
        s = jnp.where(mask[None, None], s, -jnp.inf)
    p = jax.nn.softmax(s, axis=-1)
    o = jnp.einsum('bhqk,bhkd->bhqd', p, v)
    B, H, S, dh = o.shape
    o = o.transpose(0, 2, 1, 3).reshape(B, S, H * dh)
    return lin(o, params['wp'], params['bp'])


if __name__ == "__main__":
    # Small shapes consistent with the module: dim_embed=32, n_heads=4,
    # dim_heads defaults to dim_embed -> head_dim = 8; batch=2, seq=8.
    B, S, E = 2, 8, 32
    n_heads = 4
    Dh = E  # dim_heads

    key = jax.random.PRNGKey(0)
    ks = jax.random.split(key, 12)

    def init_w(k, shape, fan_in):
        bound = 1.0 / (fan_in ** 0.5)
        return jax.random.uniform(k, shape, jnp.float32, -bound, bound)

    params = {
        'wq': init_w(ks[0], (E, Dh), E), 'bq': init_w(ks[1], (1, Dh), E),
        'wk': init_w(ks[2], (E, Dh), E), 'bk': init_w(ks[3], (1, Dh), E),
        'wv': init_w(ks[4], (E, Dh), E), 'bv': init_w(ks[5], (1, Dh), E),
        'wp': init_w(ks[6], (Dh, E), Dh), 'bp': init_w(ks[7], (1, E), Dh),
    }

    xq = jax.random.normal(ks[8], (B, S, E), jnp.float32)
    xk = jax.random.normal(ks[9], (B, S, E), jnp.float32)
    xv = jax.random.normal(ks[10], (B, S, E), jnp.float32)

    # Non-causal (module default).
    out = multi_head_attention(xq, xk, xv, params, n_heads=n_heads, is_causal=False)
    out = jax.block_until_ready(out)
    ref = _reference(xq, xk, xv, params, n_heads=n_heads, is_causal=False)
    assert out.shape == ref.shape
    # bf16 MXU operands with f32 accumulation -> tolerance loosened vs f32 ref.
    assert jnp.allclose(out, ref, atol=2e-2, rtol=2e-2), "mismatch vs reference"

    # Causal path.
    out_c = multi_head_attention(xq, xk, xv, params, n_heads=n_heads, is_causal=True)
    out_c = jax.block_until_ready(out_c)
    ref_c = _reference(xq, xk, xv, params, n_heads=n_heads, is_causal=True)
    assert jnp.allclose(out_c, ref_c, atol=2e-2, rtol=2e-2), "mismatch vs causal reference"

    print("KERNEL_OK")
</pallas_src>

<mosaic_0001>
module attributes {stable_mosaic.version = 11 : i64} {
  func.func @_mha_flash_kernel(%arg0: i32, %arg1: i32, %arg2: i32, %arg3: memref<1x4x8x8xbf16, #tpu.memory_space<vmem>>, %arg4: memref<1x4x8x8xbf16, #tpu.memory_space<vmem>>, %arg5: memref<1x4x8x8xbf16, #tpu.memory_space<vmem>>, %arg6: memref<32x32xbf16, #tpu.memory_space<vmem>>, %arg7: memref<1x32xf32, #tpu.memory_space<vmem>>, %arg8: memref<1x8x32xf32, #tpu.memory_space<vmem>>, %arg9: memref<4x8x1xf32, #tpu.memory_space<vmem>>, %arg10: memref<4x8x1xf32, #tpu.memory_space<vmem>>, %arg11: memref<4x8x8xf32, #tpu.memory_space<vmem>>, %arg12: memref<8x32xbf16, #tpu.memory_space<vmem>>) attributes {dimension_semantics = [#tpu.dimension_semantics<parallel>, #tpu.dimension_semantics<parallel>, #tpu.dimension_semantics<arbitrary>], iteration_bounds = array<i64: 2, 1, 1>, scalar_prefetch = 0 : i64, scratch_operands = 4 : i64, tpu.core_type = #tpu.core_type<tc>, window_params = [{transform_indices = @transform_0, window_bounds = array<i64: 1, 4, 8, 8>}, {transform_indices = @transform_1, window_bounds = array<i64: 1, 4, 8, 8>}, {transform_indices = @transform_2, window_bounds = array<i64: 1, 4, 8, 8>}, {pipeline_mode = #tpu.pipeline_mode<synchronous>, transform_indices = @transform_3, window_bounds = array<i64: 32, 32>}, {pipeline_mode = #tpu.pipeline_mode<synchronous>, transform_indices = @transform_4, window_bounds = array<i64: 1, 32>}, {transform_indices = @transform_5, window_bounds = array<i64: 1, 8, 32>}]} {
    %c0_i32 = arith.constant 0 : i32
    %0 = arith.cmpi eq, %arg2, %c0_i32 : i32
    %1 = arith.extui %0 : i1 to i32
    %c0_i32_0 = arith.constant 0 : i32
    %2 = arith.cmpi ne, %1, %c0_i32_0 : i32
    scf.if %2 {
      %cst_35 = arith.constant 0xFF800000 : f32
      %36 = vector.broadcast %cst_35 : f32 to vector<4x8x1xf32>
      %c0_36 = arith.constant 0 : index
      %c0_37 = arith.constant 0 : index
      %c0_38 = arith.constant 0 : index
      %37 = vector.load %arg9[%c0_36, %c0_37, %c0_38] : memref<4x8x1xf32, #tpu.memory_space<vmem>>, vector<4x8x1xf32>
      tpu.vector_store %arg9[%c0_36, %c0_37, %c0_38], %36 {strides = array<i32>} : memref<4x8x1xf32, #tpu.memory_space<vmem>>, vector<4x8x1xf32>,
      %cst_39 = arith.constant 0.000000e+00 : f32
      %38 = vector.broadcast %cst_39 : f32 to vector<4x8x1xf32>
      %c0_40 = arith.constant 0 : index
      %c0_41 = arith.constant 0 : index
      %c0_42 = arith.constant 0 : index
      %39 = vector.load %arg10[%c0_40, %c0_41, %c0_42] : memref<4x8x1xf32, #tpu.memory_space<vmem>>, vector<4x8x1xf32>
      tpu.vector_store %arg10[%c0_40, %c0_41, %c0_42], %38 {strides = array<i32>} : memref<4x8x1xf32, #tpu.memory_space<vmem>>, vector<4x8x1xf32>,
      %cst_43 = arith.constant 0.000000e+00 : f32
      %40 = vector.broadcast %cst_43 : f32 to vector<4x8x8xf32>
      %c0_44 = arith.constant 0 : index
      %c0_45 = arith.constant 0 : index
      %c0_46 = arith.constant 0 : index
      %41 = vector.load %arg11[%c0_44, %c0_45, %c0_46] : memref<4x8x8xf32, #tpu.memory_space<vmem>>, vector<4x8x8xf32>
      tpu.vector_store %arg11[%c0_44, %c0_45, %c0_46], %40 {strides = array<i32>} : memref<4x8x8xf32, #tpu.memory_space<vmem>>, vector<4x8x8xf32>,
    } else {
    }
    %c0 = arith.constant 0 : index
    %c0_1 = arith.constant 0 : index
    %c0_2 = arith.constant 0 : index
    %c0_3 = arith.constant 0 : index
    %3 = vector.load %arg3[%c0, %c0_1, %c0_2, %c0_3] : memref<1x4x8x8xbf16, #tpu.memory_space<vmem>>, vector<1x4x8x8xbf16>
    %4 = vector.shape_cast %3 : vector<1x4x8x8xbf16> to vector<4x8x8xbf16>
    %c0_4 = arith.constant 0 : index
    %c0_5 = arith.constant 0 : index
    %c0_6 = arith.constant 0 : index
    %c0_7 = arith.constant 0 : index
    %5 = vector.load %arg4[%c0_4, %c0_5, %c0_6, %c0_7] : memref<1x4x8x8xbf16, #tpu.memory_space<vmem>>, vector<1x4x8x8xbf16>
    %6 = vector.shape_cast %5 : vector<1x4x8x8xbf16> to vector<4x8x8xbf16>
    "tpu.trace_start"() <{level = 10 : i32, message = "htd,hkd->htk"}> : () -> ()
    %cst = arith.constant dense<0.000000e+00> : vector<4x8x8xf32>
    %7 = tpu.matmul %4, %6, %cst {dimension_numbers = #tpu.dot_dimension_numbers<[2], [2], [1], [1], [0, 0, 0, 1, 1, 1], [0], [0]>} : vector<4x8x8xbf16>, vector<4x8x8xbf16>, vector<4x8x8xf32> -> vector<4x8x8xf32>
    "tpu.trace_stop"() : () -> ()
    %c0_8 = arith.constant 0 : index
    %c0_9 = arith.constant 0 : index
    %c0_10 = arith.constant 0 : index
    %8 = vector.load %arg9[%c0_8, %c0_9, %c0_10] : memref<4x8x1xf32, #tpu.memory_space<vmem>>, vector<4x8x1xf32>
    %cst_11 = arith.constant dense<0xFF800000> : vector<4x8xf32>
    %9 = vector.multi_reduction <maximumf>, %7, %cst_11 [2] : vector<4x8x8xf32> to vector<4x8xf32>
    %10 = vector.shape_cast %9 : vector<4x8xf32> to vector<4x8x1xf32>
    %11 = arith.maximumf %8, %10 : vector<4x8x1xf32>
    %12 = arith.subf %8, %11 : vector<4x8x1xf32>
    %13 = math.exp %12 : vector<4x8x1xf32>
    %14 = vector.broadcast %11 : vector<4x8x1xf32> to vector<4x8x8xf32>
    %15 = arith.subf %7, %14 : vector<4x8x8xf32>
    %16 = math.exp %15 : vector<4x8x8xf32>
    %c0_12 = arith.constant 0 : index
    %c0_13 = arith.constant 0 : index
    %c0_14 = arith.constant 0 : index
    %17 = vector.load %arg10[%c0_12, %c0_13, %c0_14] : memref<4x8x1xf32, #tpu.memory_space<vmem>>, vector<4x8x1xf32>
    %18 = arith.mulf %13, %17 : vector<4x8x1xf32>
    %cst_15 = arith.constant dense<0.000000e+00> : vector<4x8xf32>
    %19 = vector.multi_reduction <add>, %16, %cst_15 [2] : vector<4x8x8xf32> to vector<4x8xf32>
    %20 = vector.shape_cast %19 : vector<4x8xf32> to vector<4x8x1xf32>
    %21 = arith.addf %18, %20 : vector<4x8x1xf32>
    %c0_16 = arith.constant 0 : index
    %c0_17 = arith.constant 0 : index
    %c0_18 = arith.constant 0 : index
    %22 = vector.load %arg10[%c0_16, %c0_17, %c0_18] : memref<4x8x1xf32, #tpu.memory_space<vmem>>, vector<4x8x1xf32>
    tpu.vector_store %arg10[%c0_16, %c0_17, %c0_18], %21 {strides = array<i32>} : memref<4x8x1xf32, #tpu.memory_space<vmem>>, vector<4x8x1xf32>,
    %c0_19 = arith.constant 0 : index
    %c0_20 = arith.constant 0 : index
    %c0_21 = arith.constant 0 : index
    %23 = vector.load %arg11[%c0_19, %c0_20, %c0_21] : memref<4x8x8xf32, #tpu.memory_space<vmem>>, vector<4x8x8xf32>
    %24 = vector.broadcast %13 : vector<4x8x1xf32> to vector<4x8x8xf32>
    %25 = arith.mulf %24, %23 : vector<4x8x8xf32>
    %26 = arith.truncf %16 : vector<4x8x8xf32> to vector<4x8x8xbf16>
    %c0_22 = arith.constant 0 : index
    %c0_23 = arith.constant 0 : index
    %c0_24 = arith.constant 0 : index
    %c0_25 = arith.constant 0 : index
    %27 = vector.load %arg5[%c0_22, %c0_23, %c0_24, %c0_25] : memref<1x4x8x8xbf16, #tpu.memory_space<vmem>>, vector<1x4x8x8xbf16>
    %28 = vector.shape_cast %27 : vector<1x4x8x8xbf16> to vector<4x8x8xbf16>
    "tpu.trace_start"() <{level = 10 : i32, message = "htk,hkd->htd"}> : () -> ()
    %cst_26 = arith.constant dense<0.000000e+00> : vector<4x8x8xf32>
    %29 = tpu.matmul %26, %28, %cst_26 {dimension_numbers = #tpu.dot_dimension_numbers<[2], [1], [1], [2], [0, 0, 0, 1, 1, 2], [0], [0]>} : vector<4x8x8xbf16>, vector<4x8x8xbf16>, vector<4x8x8xf32> -> vector<4x8x8xf32>
    "tpu.trace_stop"() : () -> ()
    %30 = arith.addf %25, %29 : vector<4x8x8xf32>
    %c0_27 = arith.constant 0 : index
    %c0_28 = arith.constant 0 : index
    %c0_29 = arith.constant 0 : index
    %31 = vector.load %arg11[%c0_27, %c0_28, %c0_29] : memref<4x8x8xf32, #tpu.memory_space<vmem>>, vector<4x8x8xf32>
    tpu.vector_store %arg11[%c0_27, %c0_28, %c0_29], %30 {strides = array<i32>} : memref<4x8x8xf32, #tpu.memory_space<vmem>>, vector<4x8x8xf32>,
    %c0_30 = arith.constant 0 : index
    %c0_31 = arith.constant 0 : index
    %c0_32 = arith.constant 0 : index
    %32 = vector.load %arg9[%c0_30, %c0_31, %c0_32] : memref<4x8x1xf32, #tpu.memory_space<vmem>>, vector<4x8x1xf32>
    tpu.vector_store %arg9[%c0_30, %c0_31, %c0_32], %11 {strides = array<i32>} : memref<4x8x1xf32, #tpu.memory_space<vmem>>, vector<4x8x1xf32>,
    %c0_i32_33 = arith.constant 0 : i32
    %33 = arith.cmpi eq, %arg2, %c0_i32_33 : i32
    %34 = arith.extui %33 : i1 to i32
    %c0_i32_34 = arith.constant 0 : i32
    %35 = arith.cmpi ne, %34, %c0_i32_34 : i32
    scf.if %35 {
      %c0_35 = arith.constant 0 : index
      %c0_36 = arith.constant 0 : index
      %c0_37 = arith.constant 0 : index
      %36 = vector.load %arg10[%c0_35, %c0_36, %c0_37] : memref<4x8x1xf32, #tpu.memory_space<vmem>>, vector<4x8x1xf32>
      %37 = tpu.reciprocal %36 {approx = true} : vector<4x8x1xf32> -> vector<4x8x1xf32>
      %c0_38 = arith.constant 0 : index
      %c0_39 = arith.constant 0 : index
      %c0_40 = arith.constant 0 : index
      %38 = vector.load %arg11[%c0_38, %c0_39, %c0_40] : memref<4x8x8xf32, #tpu.memory_space<vmem>>, vector<1x8x8xf32>
      %39 = vector.shape_cast %38 : vector<1x8x8xf32> to vector<8x8xf32>
      %40 = vector.extract_strided_slice %37 {offsets = [0, 0, 0], sizes = [1, 8, 1], strides = [1, 1, 1]} : vector<4x8x1xf32> to vector<1x8x1xf32>
      %41 = vector.shape_cast %40 : vector<1x8x1xf32> to vector<8x1xf32>
      %42 = vector.broadcast %41 : vector<8x1xf32> to vector<8x8xf32>
      %43 = arith.mulf %39, %42 : vector<8x8xf32>
      %44 = arith.truncf %43 : vector<8x8xf32> to vector<8x8xbf16>
      %c0_41 = arith.constant 0 : index
      %c0_42 = arith.constant 0 : index
      %45 = vector.load %arg12[%c0_41, %c0_42] : memref<8x32xbf16, #tpu.memory_space<vmem>>, vector<8x8xbf16>
      tpu.vector_store %arg12[%c0_41, %c0_42], %44 {strides = array<i32>} : memref<8x32xbf16, #tpu.memory_space<vmem>>, vector<8x8xbf16>,
      %c1 = arith.constant 1 : index
      %c0_43 = arith.constant 0 : index
      %c0_44 = arith.constant 0 : index
      %46 = vector.load %arg11[%c1, %c0_43, %c0_44] : memref<4x8x8xf32, #tpu.memory_space<vmem>>, vector<1x8x8xf32>
      %47 = vector.shape_cast %46 : vector<1x8x8xf32> to vector<8x8xf32>
      %48 = vector.extract_strided_slice %37 {offsets = [1, 0, 0], sizes = [1, 8, 1], strides = [1, 1, 1]} : vector<4x8x1xf32> to vector<1x8x1xf32>
      %49 = vector.shape_cast %48 : vector<1x8x1xf32> to vector<8x1xf32>
      %50 = vector.broadcast %49 : vector<8x1xf32> to vector<8x8xf32>
      %51 = arith.mulf %47, %50 : vector<8x8xf32>
      %52 = arith.truncf %51 : vector<8x8xf32> to vector<8x8xbf16>
      %c0_45 = arith.constant 0 : index
      %c8 = arith.constant 8 : index
      %53 = vector.load %arg12[%c0_45, %c8] : memref<8x32xbf16, #tpu.memory_space<vmem>>, vector<8x8xbf16>
      tpu.vector_store %arg12[%c0_45, %c8], %52 {strides = array<i32>} : memref<8x32xbf16, #tpu.memory_space<vmem>>, vector<8x8xbf16>,
      %c2 = arith.constant 2 : index
      %c0_46 = arith.constant 0 : index
      %c0_47 = arith.constant 0 : index
      %54 = vector.load %arg11[%c2, %c0_46, %c0_47] : memref<4x8x8xf32, #tpu.memory_space<vmem>>, vector<1x8x8xf32>
      %55 = vector.shape_cast %54 : vector<1x8x8xf32> to vector<8x8xf32>
      %56 = vector.extract_strided_slice %37 {offsets = [2, 0, 0], sizes = [1, 8, 1], strides = [1, 1, 1]} : vector<4x8x1xf32> to vector<1x8x1xf32>
      %57 = vector.shape_cast %56 : vector<1x8x1xf32> to vector<8x1xf32>
      %58 = vector.broadcast %57 : vector<8x1xf32> to vector<8x8xf32>
      %59 = arith.mulf %55, %58 : vector<8x8xf32>
      %60 = arith.truncf %59 : vector<8x8xf32> to vector<8x8xbf16>
      %c0_48 = arith.constant 0 : index
      %c16 = arith.constant 16 : index
      %61 = vector.load %arg12[%c0_48, %c16] : memref<8x32xbf16, #tpu.memory_space<vmem>>, vector<8x8xbf16>
      tpu.vector_store %arg12[%c0_48, %c16], %60 {strides = array<i32>} : memref<8x32xbf16, #tpu.memory_space<vmem>>, vector<8x8xbf16>,
      %c3 = arith.constant 3 : index
      %c0_49 = arith.constant 0 : index
      %c0_50 = arith.constant 0 : index
      %62 = vector.load %arg11[%c3, %c0_49, %c0_50] : memref<4x8x8xf32, #tpu.memory_space<vmem>>, vector<1x8x8xf32>
      %63 = vector.shape_cast %62 : vector<1x8x8xf32> to vector<8x8xf32>
      %64 = vector.extract_strided_slice %37 {offsets = [3, 0, 0], sizes = [1, 8, 1], strides = [1, 1, 1]} : vector<4x8x1xf32> to vector<1x8x1xf32>
      %65 = vector.shape_cast %64 : vector<1x8x1xf32> to vector<8x1xf32>
      %66 = vector.broadcast %65 : vector<8x1xf32> to vector<8x8xf32>
      %67 = arith.mulf %63, %66 : vector<8x8xf32>
      %68 = arith.truncf %67 : vector<8x8xf32> to vector<8x8xbf16>
      %c0_51 = arith.constant 0 : index
      %c24 = arith.constant 24 : index
      %69 = vector.load %arg12[%c0_51, %c24] : memref<8x32xbf16, #tpu.memory_space<vmem>>, vector<8x8xbf16>
      tpu.vector_store %arg12[%c0_51, %c24], %68 {strides = array<i32>} : memref<8x32xbf16, #tpu.memory_space<vmem>>, vector<8x8xbf16>,
      %c0_52 = arith.constant 0 : index
      %c0_53 = arith.constant 0 : index
      %70 = vector.load %arg12[%c0_52, %c0_53] : memref<8x32xbf16, #tpu.memory_space<vmem>>, vector<8x32xbf16>
      %c0_54 = arith.constant 0 : index
      %c0_55 = arith.constant 0 : index
      %71 = vector.load %arg6[%c0_54, %c0_55] : memref<32x32xbf16, #tpu.memory_space<vmem>>, vector<32x32xbf16>
      %cst_56 = arith.constant dense<0.000000e+00> : vector<8x32xf32>
      %72 = tpu.matmul %70, %71, %cst_56 {dimension_numbers = #tpu.dot_dimension_numbers<[1], [0], [0], [1], [0, 0, 1, 1], [], []>} : vector<8x32xbf16>, vector<32x32xbf16>, vector<8x32xf32> -> vector<8x32xf32>
      %c0_57 = arith.constant 0 : index
      %c0_58 = arith.constant 0 : index
      %73 = vector.load %arg7[%c0_57, %c0_58] : memref<1x32xf32, #tpu.memory_space<vmem>>, vector<1x32xf32>
      %74 = vector.broadcast %73 : vector<1x32xf32> to vector<8x32xf32>
      %75 = arith.addf %72, %74 : vector<8x32xf32>
      %c0_59 = arith.constant 0 : index
      %c0_60 = arith.constant 0 : index
      %c0_61 = arith.constant 0 : index
      %76 = vector.load %arg8[%c0_59, %c0_60, %c0_61] : memref<1x8x32xf32, #tpu.memory_space<vmem>>, vector<1x8x32xf32>
      %77 = vector.shape_cast %76 : vector<1x8x32xf32> to vector<8x32xf32>
      %78 = vector.shape_cast %75 : vector<8x32xf32> to vector<1x8x32xf32>
      tpu.vector_store %arg8[%c0_59, %c0_60, %c0_61], %78 {strides = array<i32>} : memref<1x8x32xf32, #tpu.memory_space<vmem>>, vector<1x8x32xf32>,
    } else {
    }
    return
  }
  func.func @transform_0(%arg0: i32, %arg1: i32, %arg2: i32) -> (i32, i32, i32, i32) {
    %c0_i32 = arith.constant 0 : i32
    %c0_i32_0 = arith.constant 0 : i32
    %c0_i32_1 = arith.constant 0 : i32
    return %arg0, %c0_i32, %arg1, %c0_i32_0 : i32, i32, i32, i32
  }
  func.func @transform_1(%arg0: i32, %arg1: i32, %arg2: i32) -> (i32, i32, i32, i32) {
    %c0_i32 = arith.constant 0 : i32
    %c0_i32_0 = arith.constant 0 : i32
    %c0_i32_1 = arith.constant 0 : i32
    return %arg0, %c0_i32, %arg2, %c0_i32_0 : i32, i32, i32, i32
  }
  func.func @transform_2(%arg0: i32, %arg1: i32, %arg2: i32) -> (i32, i32, i32, i32) {
    %c0_i32 = arith.constant 0 : i32
    %c0_i32_0 = arith.constant 0 : i32
    %c0_i32_1 = arith.constant 0 : i32
    return %arg0, %c0_i32, %arg2, %c0_i32_0 : i32, i32, i32, i32
  }
  func.func @transform_3(%arg0: i32, %arg1: i32, %arg2: i32) -> (i32, i32) {
    %c0_i32 = arith.constant 0 : i32
    %c0_i32_0 = arith.constant 0 : i32
    %c0_i32_1 = arith.constant 0 : i32
    return %c0_i32, %c0_i32_0 : i32, i32
  }
  func.func @transform_4(%arg0: i32, %arg1: i32, %arg2: i32) -> (i32, i32) {
    %c0_i32 = arith.constant 0 : i32
    %c0_i32_0 = arith.constant 0 : i32
    %c0_i32_1 = arith.constant 0 : i32
    return %c0_i32, %c0_i32_0 : i32, i32
  }
  func.func @transform_5(%arg0: i32, %arg1: i32, %arg2: i32) -> (i32, i32, i32) {
    %c0_i32 = arith.constant 0 : i32
    %c0_i32_0 = arith.constant 0 : i32
    return %arg0, %arg1, %c0_i32 : i32, i32, i32
  }
}

</mosaic_0001>

<llo_original>
// kernel: tpu_custom_call.1
$region0: #{tpu_custom_call.1}
  #allocation0 [shape = 'u32[]', space=smem, size = 0x4, offset = 0x4, fixed_abs, tag = 'smem constant byte address 0x4 - core index']
  #allocation1 [shape = 'u32[144,128]{1,0:T(1,128)}', space=vmem, size = 0x12000, scoped, tag = 'internal scratch']
  #allocation2 [shape = 'f32[4,8,1]{2,1,0:T(8,128)}', space=vmem, size = 0x4000, scoped, tag = 'scratch operand']
  #allocation3 [shape = 'f32[4,8,1]{2,1,0:T(8,128)}', space=vmem, size = 0x4000, scoped, tag = 'scratch operand']
  #allocation4 [shape = 'f32[4,8,8]{2,1,0:T(8,128)}', space=vmem, size = 0x4000, scoped, tag = 'scratch operand']
  #allocation5 [shape = 'bf16[8,32]{1,0:T(8,128)(2,1)}', space=vmem, size = 0x800, scoped, tag = 'scratch operand']
  %s0 = inlined_call_operand.hbm [shape: bf16[2,4,8,8], index: 0, kind: input, shape index: {}]
  %s1 = inlined_call_operand.hbm [shape: bf16[2,4,8,8], index: 1, kind: input, shape index: {}]
  %s2 = inlined_call_operand.hbm [shape: bf16[2,4,8,8], index: 2, kind: input, shape index: {}]
  %s3 = inlined_call_operand.hbm [shape: bf16[32,32], index: 3, kind: input, shape index: {}]
  %s4 = inlined_call_operand.vmem [shape: f32[1,32], index: 4, kind: input, shape index: {}]
  %s5 = inlined_call_operand.hbm [shape: f32[2,8,32], index: 5, kind: output, shape index: {}]
  %s6 = sld [smem:[#allocation0]]
  $region77: #{tpu_custom_call.1} parent=0
    _
  %s8 = ssub.s32 1, %s6
  %s9 = scalar_select 0, %s8, %s6
  $region1: #{tpu_custom_call.1} parent=0
    #allocation6 [shape = 'u8[16384]{0}', space=vmem, size = 0x4000, scoped, tag = 'input window, operand 0']
    #allocation7 [shape = 's32[2]{0}', space=sflag, size = 0x8, scoped, tag = 'scoped memory for tpu_custom_call.1']
    #allocation8 [shape = 's32[2]{0}', space=sflag, size = 0x8, scoped, tag = 'scoped memory for tpu_custom_call.1']
    #allocation9 [shape = 'u8[16384]{0}', space=vmem, size = 0x4000, scoped, tag = 'input window, operand 1']
    #allocation10 [shape = 's32[2]{0}', space=sflag, size = 0x8, scoped, tag = 'scoped memory for tpu_custom_call.1']
    #allocation11 [shape = 'u8[16384]{0}', space=vmem, size = 0x4000, scoped, tag = 'input window, operand 2']
    #allocation12 [shape = 'u8[8192]{0}', space=vmem, size = 0x2000, scoped, tag = 'input window, operand 3, single buffered']
    #allocation13 [shape = 's32[1]{0}', space=sflag, size = 0x4, scoped, tag = 'scoped memory for tpu_custom_call.1']
    #allocation14 [shape = 'u8[8192]{0}', space=vmem, size = 0x2000, scoped, tag = 'output window, operand 0']
    %10 = vsyncpa [#allocation7], 0
    %s11 = scalar_lea.sflag [#allocation7], 1
    %12 = vsyncpa %s11, 0
    %13 = vsyncpa [#allocation10], 0
    %s14 = scalar_lea.sflag [#allocation10], 1
    %15 = vsyncpa %s14, 0
    %16 = vsyncpa [#allocation13], 0
    %17 = vsyncpa [#allocation8], 0
    %s18 = scalar_lea.sflag [#allocation8], 1
    %19 = vsyncpa %s18, 0
    loop: start=0, step=1, limit=4
    $region2: #{tpu_custom_call.1} parent=1 // loop_pre_header
      _
    $region3: #{tpu_custom_call.1} parent=1 // loop_header
      %s21 = sphi 0, %s25
      %p22 = scmp.ge.s32.totalorder %s21, 4
      %s28 = sphi 0, %s47
      %s29 = sphi 0, %s43
      %s30 = sphi 0, %s39
      %s31 = sphi 0, %s28
      %s32 = sphi 0, %s29
      %s33 = sphi 0, %s30
      %s34 = sphi 0, %s31
      %s35 = sphi 0, %s32
      %s36 = sphi 0, %s33
      %s52 = sphi 0, %s54
      %s55 = sphi 0, %s52
      %s56 = sphi 0, %s55
      %s72 = sphi 0, %s56
      %s80 = sphi 0, %s82
      %s83 = sphi 0, %s80
      %s84 = sphi 0, %s83
      %s100 = sphi 0, %s84
      %s108 = sphi 0, %s110
      %s111 = sphi 0, %s108
      %s112 = sphi 0, %s111
      %s128 = sphi 0, %s112
      %s132 = sphi 0, %s132
      %s134 = sphi 0, %s132
      %s135 = sphi 0, %s134
      %s149 = sphi 0, %s135
      %s153 = sphi 0, %s153
      %s155 = sphi 0, %s153
      %s156 = sphi 0, %s155
      %s170 = sphi 0, %s156
      %s178 = sphi 0, %s180
      %s181 = sphi 0, %s178
      %s182 = sphi 0, %s181
      %s198 = sphi 0, %s182
    $region4: #{tpu_custom_call.1} parent=1 // loop_header_branch
      %24 = sbr.rel (%p22) target = $region8
    $region5: #{tpu_custom_call.1} parent=1 // loop_body
      %s26 = ssub.s32 %s21, 1
      %s27 = ssub.s32 %s21, 2
      %s37 = sadd.s32 1, %s30
      %p38 = scmp.ge.s32.totalorder %s37, 1
      %s39 = scalar_select %p38, 0, %s37
      %s40 = sadd.s32 1, %s29
      %s41 = scalar_select %p38, %s40, %s29
      %p42 = scmp.ge.s32.totalorder %s41, 1
      %s43 = scalar_select %p42, 0, %s41
      %s44 = sadd.s32 1, %s28
      %s45 = scalar_select %p42, %s44, %s28
      %p46 = scmp.ge.s32.totalorder %s45, 2
      %s47 = scalar_select %p46, 0, %s45
      %s48 = ssub.s32 %s28, %s47
      %s49 = ssub.s32 %s29, %s43
      %s50 = sor.u32 %s48, %s49
      %p51 = scmp.eq.s32.totalorder %s50, 0
      %s53 = sadd.s32 %s52, 1
      %s54 = scalar_select %p51, %s52, %s53
      %p57 = pneg %p51
      %p58 = scmp.eq.s32.totalorder %s21, 1
      %p59 = por %p57, %p58
      %p60 = scmp.ne.s32.totalorder %s52, %s55
      %p61 = scmp.eq.s32.totalorder %s21, 0
      %p62 = por %p60, %p61
      %p63 = scmp.ne.s32.totalorder %s52, %s55
      %p64 = scmp.eq.s32.totalorder %s26, 1
      %p65 = por %p63, %p64
      %p66 = scmp.ne.s32.totalorder %s55, %s56
      %p67 = scmp.eq.s32.totalorder %s26, 0
      %p68 = por %p66, %p67
      %p69 = scmp.ne.s32.totalorder %s55, %s56
      %p70 = scmp.eq.s32.totalorder %s27, 1
      %p71 = por %p69, %p70
      %p73 = scmp.ne.s32.totalorder %s56, %s72
      %p74 = scmp.eq.s32.totalorder %s27, 0
      %p75 = por %p73, %p74
      %s76 = ssub.s32 %s28, %s47
      %s77 = ssub.s32 %s30, %s39
      %s78 = sor.u32 %s76, %s77
      %p79 = scmp.eq.s32.totalorder %s78, 0
      %s81 = sadd.s32 %s80, 1
      %s82 = scalar_select %p79, %s80, %s81
      %p85 = pneg %p79
      %p86 = scmp.eq.s32.totalorder %s21, 1
      %p87 = por %p85, %p86
      %p88 = scmp.ne.s32.totalorder %s80, %s83
      %p89 = scmp.eq.s32.totalorder %s21, 0
      %p90 = por %p88, %p89
      %p91 = scmp.ne.s32.totalorder %s80, %s83
      %p92 = scmp.eq.s32.totalorder %s26, 1
      %p93 = por %p91, %p92
      %p94 = scmp.ne.s32.totalorder %s83, %s84
      %p95 = scmp.eq.s32.totalorder %s26, 0
      %p96 = por %p94, %p95
      %p97 = scmp.ne.s32.totalorder %s83, %s84
      %p98 = scmp.eq.s32.totalorder %s27, 1
      %p99 = por %p97, %p98
      %p101 = scmp.ne.s32.totalorder %s84, %s100
      %p102 = scmp.eq.s32.totalorder %s27, 0
      %p103 = por %p101, %p102
      %s104 = ssub.s32 %s28, %s47
      %s105 = ssub.s32 %s30, %s39
      %s106 = sor.u32 %s104, %s105
      %p107 = scmp.eq.s32.totalorder %s106, 0
      %s109 = sadd.s32 %s108, 1
      %s110 = scalar_select %p107, %s108, %s109
      %p113 = pneg %p107
      %p114 = scmp.eq.s32.totalorder %s21, 1
      %p115 = por %p113, %p114
      %p116 = scmp.ne.s32.totalorder %s108, %s111
      %p117 = scmp.eq.s32.totalorder %s21, 0
      %p118 = por %p116, %p117
      %p119 = scmp.ne.s32.totalorder %s108, %s111
      %p120 = scmp.eq.s32.totalorder %s26, 1
      %p121 = por %p119, %p120
      %p122 = scmp.ne.s32.totalorder %s111, %s112
      %p123 = scmp.eq.s32.totalorder %s26, 0
      %p124 = por %p122, %p123
      %p125 = scmp.ne.s32.totalorder %s111, %s112
      %p126 = scmp.eq.s32.totalorder %s27, 1
      %p127 = por %p125, %p126
      %p129 = scmp.ne.s32.totalorder %s112, %s128
      %p130 = scmp.eq.s32.totalorder %s27, 0
      %p131 = por %p129, %p130
      %s133 = sadd.s32 %s132, 1
      %p136 = scmp.eq.s32.totalorder %s21, 1
      %p137 = scmp.ne.s32.totalorder %s132, %s134
      %p138 = scmp.eq.s32.totalorder %s21, 0
      %p139 = por %p137, %p138
      %p140 = scmp.ne.s32.totalorder %s132, %s134
      %p141 = scmp.eq.s32.totalorder %s26, 1
      %p142 = por %p140, %p141
      %p143 = scmp.ne.s32.totalorder %s134, %s135
      %p144 = scmp.eq.s32.totalorder %s26, 0
      %p145 = por %p143, %p144
      %p146 = scmp.ne.s32.totalorder %s134, %s135
      %p147 = scmp.eq.s32.totalorder %s27, 1
      %p148 = por %p146, %p147
      %p150 = scmp.ne.s32.totalorder %s135, %s149
      %p151 = scmp.eq.s32.totalorder %s27, 0
      %p152 = por %p150, %p151
      %s154 = sadd.s32 %s153, 1
      %p157 = scmp.eq.s32.totalorder %s21, 1
      %p158 = scmp.ne.s32.totalorder %s153, %s155
      %p159 = scmp.eq.s32.totalorder %s21, 0
      %p160 = por %p158, %p159
      %p161 = scmp.ne.s32.totalorder %s153, %s155
      %p162 = scmp.eq.s32.totalorder %s26, 1
      %p163 = por %p161, %p162
      %p164 = scmp.ne.s32.totalorder %s155, %s156
      %p165 = scmp.eq.s32.totalorder %s26, 0
      %p166 = por %p164, %p165
      %p167 = scmp.ne.s32.totalorder %s155, %s156
      %p168 = scmp.eq.s32.totalorder %s27, 1
      %p169 = por %p167, %p168
      %p171 = scmp.ne.s32.totalorder %s156, %s170
      %p172 = scmp.eq.s32.totalorder %s27, 0
      %p173 = por %p171, %p172
      %s174 = ssub.s32 %s28, %s47
      %s175 = ssub.s32 %s29, %s43
      %s176 = sor.u32 %s174, %s175
      %p177 = scmp.eq.s32.totalorder %s176, 0
      %s179 = sadd.s32 %s178, 1
      %s180 = scalar_select %p177, %s178, %s179
      %p183 = pneg %p177
      %p184 = scmp.eq.s32.totalorder %s21, 1
      %p185 = por %p183, %p184
      %p186 = scmp.ne.s32.totalorder %s178, %s181
      %p187 = scmp.eq.s32.totalorder %s21, 0
      %p188 = por %p186, %p187
      %p189 = scmp.ne.s32.totalorder %s178, %s181
      %p190 = scmp.eq.s32.totalorder %s26, 1
      %p191 = por %p189, %p190
      %p192 = scmp.ne.s32.totalorder %s181, %s182
      %p193 = scmp.eq.s32.totalorder %s26, 0
      %p194 = por %p192, %p193
      %p195 = scmp.ne.s32.totalorder %s181, %s182
      %p196 = scmp.eq.s32.totalorder %s27, 1
      %p197 = por %p195, %p196
      %p199 = scmp.ne.s32.totalorder %s182, %s198
      %p200 = scmp.eq.s32.totalorder %s27, 0
      %p201 = por %p199, %p200
      %p202 = scmp.le.s32.totalorder 1, %s21
      %p203 = scmp.lt.s32.totalorder %s21, 3
      %p204 = pnand %p202, %p203
      %p205 = pneg %p204
      // Predicated region
      $region9: #{tpu_custom_call.1} parent=5 // pred_check
        _
      $region10: #{tpu_custom_call.1} parent=5 // pred_check_branch
        %207 = sbr.rel (%p204) target = $region12
      $region11: #{tpu_custom_call.1} parent=5 // pred_region
        %s208 = ssub.s32 %s21, 1
        // Predicated region
        $region13: #{tpu_custom_call.1} parent=11 // pred_check
          %p209 = pneg %p145
        $region14: #{tpu_custom_call.1} parent=11 // pred_check_branch
          %211 = sbr.rel (%p209) target = $region16
        $region15: #{tpu_custom_call.1} parent=11 // pred_region
          %s213 = ssub.s32 256, 256
          %214 = vsyncadd [#allocation13], %s213
          %s215 = sshll.u32 [#allocation12], 4
          %s216 = int_to_ptr.vmem [resolvable:$true] %s215
          %221 = dma.hbm_to_vmem [thread:$0]  %s3, 256, %s216, [#allocation13], 64, 64, 4
        $region16: #{tpu_custom_call.1} parent=11 // pred_fallthru
          _
        // Predicated region
        $region17: #{tpu_custom_call.1} parent=11 // pred_check
          %p222 = pneg %p166
        $region18: #{tpu_custom_call.1} parent=11 // pred_check_branch
          %224 = sbr.rel (%p222) target = $region20
        $region19: #{tpu_custom_call.1} parent=11 // pred_region
          _
        $region20: #{tpu_custom_call.1} parent=11 // pred_fallthru
          _
      $region12: #{tpu_custom_call.1} parent=5 // pred_fallthru
        _
      %p225 = scmp.lt.s32.totalorder %s21, 2
      // Predicated region
      $region21: #{tpu_custom_call.1} parent=5 // pred_check
        %p226 = pneg %p225
      $region22: #{tpu_custom_call.1} parent=5 // pred_check_branch
        %228 = sbr.rel (%p226) target = $region24
      $region23: #{tpu_custom_call.1} parent=5 // pred_region
        // Predicated region
        $region25: #{tpu_custom_call.1} parent=23 // pred_check
          %p229 = pneg %p62
        $region26: #{tpu_custom_call.1} parent=23 // pred_check_branch
          %231 = sbr.rel (%p229) target = $region28
        $region27: #{tpu_custom_call.1} parent=23 // pred_region
          %s232 = sand.u32 %s52, 1
          %s233 = scalar_lea.sflag [#allocation7], %s232
          %s234 = sand.u32 %s52, 1
          %s235 = smul.addr %s234, 16
          %s236 = scalar_lea.vmem [#allocation6], %s235
          %s238 = ssub.s32 256, 256
          %239 = vsyncadd %s233, %s238
          %s240 = smul.addr %s28, 4
          %s241 = sadd.s32 %s29, %s240
          %s242 = smul.addr %s241, 64
          %s243 = scalar_lea.hbm %s0, %s242
          %s244 = sshll.u32 %s236, 4
          %s245 = int_to_ptr.vmem [resolvable:$true] %s244
          %250 = dma.hbm_to_vmem [thread:$0]  %s243, 256, %s245, %s233, 64, 64, 4
        $region28: #{tpu_custom_call.1} parent=23 // pred_fallthru
          _
        // Predicated region
        $region29: #{tpu_custom_call.1} parent=23 // pred_check
          %p251 = pneg %p90
        $region30: #{tpu_custom_call.1} parent=23 // pred_check_branch
          %253 = sbr.rel (%p251) target = $region32
        $region31: #{tpu_custom_call.1} parent=23 // pred_region
          %s254 = sand.u32 %s21, 1
          %s255 = scalar_lea.sflag [#allocation10], %s254
          %s256 = sand.u32 %s80, 1
          %s257 = smul.addr %s256, 16
          %s258 = scalar_lea.vmem [#allocation9], %s257
          %s260 = ssub.s32 256, 256
          %261 = vsyncadd %s255, %s260
          %s262 = smul.addr %s28, 4
          %s263 = sadd.s32 %s30, %s262
          %s264 = smul.addr %s263, 64
          %s265 = scalar_lea.hbm %s1, %s264
          %s266 = sshll.u32 %s258, 4
          %s267 = int_to_ptr.vmem [resolvable:$true] %s266
          %272 = dma.hbm_to_vmem [thread:$0]  %s265, 256, %s267, %s255, 64, 64, 4
        $region32: #{tpu_custom_call.1} parent=23 // pred_fallthru
          _
        // Predicated region
        $region33: #{tpu_custom_call.1} parent=23 // pred_check
          %p273 = pneg %p118
        $region34: #{tpu_custom_call.1} parent=23 // pred_check_branch
          %275 = sbr.rel (%p273) target = $region36
        $region35: #{tpu_custom_call.1} parent=23 // pred_region
          %s276 = sand.u32 %s21, 1
          %s277 = scalar_lea.sflag [#allocation10], %s276
          %s278 = sand.u32 %s108, 1
          %s279 = smul.addr %s278, 16
          %s280 = scalar_lea.vmem [#allocation11], %s279
          %s282 = ssub.s32 256, 256
          %283 = vsyncadd %s277, %s282
          %s284 = smul.addr %s28, 4
          %s285 = sadd.s32 %s30, %s284
          %s286 = smul.addr %s285, 64
          %s287 = scalar_lea.hbm %s2, %s286
          %s288 = sshll.u32 %s280, 4
          %s289 = int_to_ptr.vmem [resolvable:$true] %s288
          %294 = dma.hbm_to_vmem [thread:$0]  %s287, 256, %s289, %s277, 64, 64, 4
        $region36: #{tpu_custom_call.1} parent=23 // pred_fallthru
          _
      $region24: #{tpu_custom_call.1} parent=5 // pred_fallthru
        _
      %p295 = scmp.le.s32.totalorder 1, %s21
      %p296 = scmp.lt.s32.totalorder %s21, 3
      %p297 = pnand %p295, %p296
      %p298 = pneg %p297
      // Predicated region
      $region37: #{tpu_custom_call.1} parent=5 // pred_check
        _
      $region38: #{tpu_custom_call.1} parent=5 // pred_check_branch
        %300 = sbr.rel (%p297) target = $region40
      $region39: #{tpu_custom_call.1} parent=5 // pred_region
        %s301 = ssub.s32 %s21, 1
        %s302 = sand.u32 %s55, 1
        %s303 = scalar_lea.sflag [#allocation7], %s302
        %s304 = sand.u32 %s55, 1
        %s305 = smul.addr %s304, 16
        %s306 = scalar_lea.vmem [#allocation6], %s305
        // Predicated region
        $region41: #{tpu_custom_call.1} parent=39 // pred_check
          %p307 = pneg %p68
        $region42: #{tpu_custom_call.1} parent=39 // pred_check_branch
          %309 = sbr.rel (%p307) target = $region44
        $region43: #{tpu_custom_call.1} parent=39 // pred_region
          %310 = dma.done %s303, 256
        $region44: #{tpu_custom_call.1} parent=39 // pred_fallthru
          _
        %s311 = sand.u32 %s26, 1
        %s312 = scalar_lea.sflag [#allocation10], %s311
        %s313 = sand.u32 %s83, 1
        %s314 = smul.addr %s313, 16
        %s315 = scalar_lea.vmem [#allocation9], %s314
        // Predicated region
        $region45: #{tpu_custom_call.1} parent=39 // pred_check
          %p316 = pneg %p96
        $region46: #{tpu_custom_call.1} parent=39 // pred_check_branch
          %318 = sbr.rel (%p316) target = $region48
        $region47: #{tpu_custom_call.1} parent=39 // pred_region
          %319 = dma.done %s312, 256
        $region48: #{tpu_custom_call.1} parent=39 // pred_fallthru
          _
        %s320 = sand.u32 %s26, 1
        %s321 = scalar_lea.sflag [#allocation10], %s320
        %s322 = sand.u32 %s111, 1
        %s323 = smul.addr %s322, 16
        %s324 = scalar_lea.vmem [#allocation11], %s323
        // Predicated region
        $region49: #{tpu_custom_call.1} parent=39 // pred_check
          %p325 = pneg %p124
        $region50: #{tpu_custom_call.1} parent=39 // pred_check_branch
          %327 = sbr.rel (%p325) target = $region52
        $region51: #{tpu_custom_call.1} parent=39 // pred_region
          %328 = dma.done %s321, 256
        $region52: #{tpu_custom_call.1} parent=39 // pred_fallthru
          _
        // Predicated region
        $region53: #{tpu_custom_call.1} parent=39 // pred_check
          %p329 = pneg %p145
        $region54: #{tpu_custom_call.1} parent=39 // pred_check_branch
          %331 = sbr.rel (%p329) target = $region56
        $region55: #{tpu_custom_call.1} parent=39 // pred_region
          %332 = dma.done [#allocation13], 256
        $region56: #{tpu_custom_call.1} parent=39 // pred_fallthru
          _
        %s333 = sand.u32 %s55, 1
        %s334 = scalar_lea.sflag [#allocation7], %s333
        %s335 = sand.u32 %s55, 1
        %s336 = smul.addr %s335, 16
        %s337 = scalar_lea.vmem [#allocation6], %s336
        %p338 = pneg %p68
        %p339 = pneg %p65
        %s340 = sand.u32 %s26, 1
        %s341 = scalar_lea.sflag [#allocation10], %s340
        %s342 = sand.u32 %s83, 1
        %s343 = smul.addr %s342, 16
        %s344 = scalar_lea.vmem [#allocation9], %s343
        %p345 = pneg %p96
        %p346 = pneg %p93
        %s347 = sand.u32 %s26, 1
        %s348 = scalar_lea.sflag [#allocation10], %s347
        %s349 = sand.u32 %s111, 1
        %s350 = smul.addr %s349, 16
        %s351 = scalar_lea.vmem [#allocation11], %s350
        %p352 = pneg %p124
        %p353 = pneg %p121
        %p354 = pneg %p145
        %p355 = pneg %p142
        %p356 = pneg %p166
        %p357 = pneg %p163
        %p358 = pneg %p194
        %p359 = pneg %p191
        %s360 = sand.u32 %s181, 1
        %s361 = scalar_lea.sflag [#allocation8], %s360
        %s362 = sand.u32 %s181, 1
        %s363 = smul.addr %s362, 8
        %s364 = scalar_lea.vmem [#allocation14], %s363
        %p366 = scmp.eq.s32.totalorder %s33, 0
        // Predicated region
        $region57: #{tpu_custom_call.1} parent=39 // pred_check
          %p367 = pneg %p366
        $region58: #{tpu_custom_call.1} parent=39 // pred_check_branch
          %369 = sbr.rel (%p367) target = $region60
        $region59: #{tpu_custom_call.1} parent=39 // pred_region
          %vm370 = vcmask 7168
          %371 = vst.msk [vmem:[#allocation2] sm:$0xff] %vm370, -inf
          %372 = vst.msk [vmem:[#allocation2 + $0x8] sm:$0xff] %vm370, -inf
          %373 = vst.msk [vmem:[#allocation2 + $0x10] sm:$0xff] %vm370, -inf
          %374 = vst.msk [vmem:[#allocation2 + $0x18] sm:$0xff] %vm370, -inf
          %375 = vst.msk [vmem:[#allocation3] sm:$0xff] %vm370, 0.0
          %376 = vst.msk [vmem:[#allocation3 + $0x8] sm:$0xff] %vm370, 0.0
          %377 = vst.msk [vmem:[#allocation3 + $0x10] sm:$0xff] %vm370, 0.0
          %378 = vst.msk [vmem:[#allocation3 + $0x18] sm:$0xff] %vm370, 0.0
          %vm379 = vcmask 64512
          %380 = vst.msk [vmem:[#allocation4] sm:$0xff] %vm379, 0.0
          %381 = vst.msk [vmem:[#allocation4 + $0x8] sm:$0xff] %vm379, 0.0
          %382 = vst.msk [vmem:[#allocation4 + $0x10] sm:$0xff] %vm379, 0.0
          %383 = vst.msk [vmem:[#allocation4 + $0x18] sm:$0xff] %vm379, 0.0
        $region60: #{tpu_custom_call.1} parent=39 // pred_fallthru
          _
        %v384 = vld [vmem:[%s306] sm:$0xf]
        %v385 = vld [vmem:[%s306 + $0x4] sm:$0xf]
        %v386 = vld [vmem:[%s306 + $0x8] sm:$0xf]
        %v387 = vld [vmem:[%s306 + $0xc] sm:$0xf]
        %v388 = vld [vmem:[%s315] sm:$0xf]
        %v389 = vld [vmem:[%s315 + $0x4] sm:$0xf]
        %v390 = vld [vmem:[%s315 + $0x8] sm:$0xf]
        %v391 = vld [vmem:[%s315 + $0xc] sm:$0xf]
        %vm392 = vcmask 64512
        %v394 = vsel %vm392, %v384, 0
        %v397 = vsel %vm392, %v388, 0
        %399 = vmatprep.subr.bf16.mxu0 0
        %400 = vmatpush1.bf16.xpose.msra.mxu0 %v397
        %401 = vmatprep.subr.bf16.mxu0 0
        %402 = vmatpush1.bf16.xpose.msra.mxu0 0
        %403 = vmatprep.subr.bf16.mxu0 0
        %404 = vmatpush1.bf16.xpose.msra.mxu0 0
        %405 = vmatprep.subr.bf16.mxu0 0
        %406 = vmatpush1.bf16.xpose.msra.mxu0 0
        %407 = vmatprep.subr.bf16.mxu0 0
        %408 = vmatpush1.bf16.xpose.msra.mxu0 0
        %409 = vmatprep.subr.bf16.mxu0 0
        %410 = vmatpush1.bf16.xpose.msra.mxu0 0
        %411 = vmatprep.subr.bf16.mxu0 0
        %412 = vmatpush1.bf16.xpose.msra.mxu0 0
        %413 = vmatprep.subr.bf16.mxu0 0
        %414 = vmatpush1.bf16.xpose.msra.mxu0 0
        %415 = vmatprep.subr.bf16.mxu0 0
        %416 = vmatpush1.bf16.xpose.msra.mxu0 0
        %417 = vmatprep.subr.bf16.mxu0 0
        %418 = vmatpush1.bf16.xpose.msra.mxu0 0
        %419 = vmatprep.subr.bf16.mxu0 0
        %420 = vmatpush1.bf16.xpose.msra.mxu0 0
        %421 = vmatprep.subr.bf16.mxu0 0
        %422 = vmatpush1.bf16.xpose.msra.mxu0 0
        %423 = vmatprep.subr.bf16.mxu0 0
        %424 = vmatpush1.bf16.xpose.msra.mxu0 0
        %425 = vmatprep.subr.bf16.mxu0 0
        %426 = vmatpush1.bf16.xpose.msra.mxu0 0
        %427 = vmatprep.subr.bf16.mxu0 0
        %428 = vmatpush1.bf16.xpose.msra.mxu0 0
        %429 = vmatprep.subr.bf16.mxu0 0
        %430 = vmatpush1.bf16.xpose.msra.mxu0 0
        %431 = vmatprep.mubr.bf16.mxu0 0
        %432 = vmatmul.mubr.bf16.gmra.mrb[0].mxu0 %v394
        %v433 = vpop.f32.mrb[0].mxu0
        %v434 = vadd.f32 0.0, %v433
        %v435 = vpop.f32.mrb[0].mxu0
        %v436 = vpop.f32.mrb[0].mxu0
        %v437 = vpop.f32.mrb[0].mxu0
        %438 = vdwg.mxu0
        %v440 = vsel %vm392, %v385, 0
        %v443 = vsel %vm392, %v389, 0
        %445 = vmatprep.subr.bf16.mxu0 0
        %446 = vmatpush1.bf16.xpose.msra.mxu0 %v443
        %447 = vmatprep.subr.bf16.mxu0 0
        %448 = vmatpush1.bf16.xpose.msra.mxu0 0
        %449 = vmatprep.subr.bf16.mxu0 0
        %450 = vmatpush1.bf16.xpose.msra.mxu0 0
        %451 = vmatprep.subr.bf16.mxu0 0
        %452 = vmatpush1.bf16.xpose.msra.mxu0 0
        %453 = vmatprep.subr.bf16.mxu0 0
        %454 = vmatpush1.bf16.xpose.msra.mxu0 0
        %455 = vmatprep.subr.bf16.mxu0 0
        %456 = vmatpush1.bf16.xpose.msra.mxu0 0
        %457 = vmatprep.subr.bf16.mxu0 0
        %458 = vmatpush1.bf16.xpose.msra.mxu0 0
        %459 = vmatprep.subr.bf16.mxu0 0
        %460 = vmatpush1.bf16.xpose.msra.mxu0 0
        %461 = vmatprep.subr.bf16.mxu0 0
        %462 = vmatpush1.bf16.xpose.msra.mxu0 0
        %463 = vmatprep.subr.bf16.mxu0 0
        %464 = vmatpush1.bf16.xpose.msra.mxu0 0
        %465 = vmatprep.subr.bf16.mxu0 0
        %466 = vmatpush1.bf16.xpose.msra.mxu0 0
        %467 = vmatprep.subr.bf16.mxu0 0
        %468 = vmatpush1.bf16.xpose.msra.mxu0 0
        %469 = vmatprep.subr.bf16.mxu0 0
        %470 = vmatpush1.bf16.xpose.msra.mxu0 0
        %471 = vmatprep.subr.bf16.mxu0 0
        %472 = vmatpush1.bf16.xpose.msra.mxu0 0
        %473 = vmatprep.subr.bf16.mxu0 0
        %474 = vmatpush1.bf16.xpose.msra.mxu0 0
        %475 = vmatprep.subr.bf16.mxu0 0
        %476 = vmatpush1.bf16.xpose.msra.mxu0 0
        %477 = vmatprep.mubr.bf16.mxu0 0
        %478 = vmatmul.mubr.bf16.gmra.mrb[0].mxu0 %v440
        %v479 = vpop.f32.mrb[0].mxu0
        %v480 = vadd.f32 0.0, %v479
        %v481 = vpop.f32.mrb[0].mxu0
        %v482 = vpop.f32.mrb[0].mxu0
        %v483 = vpop.f32.mrb[0].mxu0
        %484 = vdwg.mxu0
        %v486 = vsel %vm392, %v386, 0
        %v489 = vsel %vm392, %v390, 0
        %491 = vmatprep.subr.bf16.mxu0 0
        %492 = vmatpush1.bf16.xpose.msra.mxu0 %v489
        %493 = vmatprep.subr.bf16.mxu0 0
        %494 = vmatpush1.bf16.xpose.msra.mxu0 0
        %495 = vmatprep.subr.bf16.mxu0 0
        %496 = vmatpush1.bf16.xpose.msra.mxu0 0
        %497 = vmatprep.subr.bf16.mxu0 0
        %498 = vmatpush1.bf16.xpose.msra.mxu0 0
        %499 = vmatprep.subr.bf16.mxu0 0
        %500 = vmatpush1.bf16.xpose.msra.mxu0 0
        %501 = vmatprep.subr.bf16.mxu0 0
        %502 = vmatpush1.bf16.xpose.msra.mxu0 0
        %503 = vmatprep.subr.bf16.mxu0 0
        %504 = vmatpush1.bf16.xpose.msra.mxu0 0
        %505 = vmatprep.subr.bf16.mxu0 0
        %506 = vmatpush1.bf16.xpose.msra.mxu0 0
        %507 = vmatprep.subr.bf16.mxu0 0
        %508 = vmatpush1.bf16.xpose.msra.mxu0 0
        %509 = vmatprep.subr.bf16.mxu0 0
        %510 = vmatpush1.bf16.xpose.msra.mxu0 0
        %511 = vmatprep.subr.bf16.mxu0 0
        %512 = vmatpush1.bf16.xpose.msra.mxu0 0
        %513 = vmatprep.subr.bf16.mxu0 0
        %514 = vmatpush1.bf16.xpose.msra.mxu0 0
        %515 = vmatprep.subr.bf16.mxu0 0
        %516 = vmatpush1.bf16.xpose.msra.mxu0 0
        %517 = vmatprep.subr.bf16.mxu0 0
        %518 = vmatpush1.bf16.xpose.msra.mxu0 0
        %519 = vmatprep.subr.bf16.mxu0 0
        %520 = vmatpush1.bf16.xpose.msra.mxu0 0
        %521 = vmatprep.subr.bf16.mxu0 0
        %522 = vmatpush1.bf16.xpose.msra.mxu0 0
        %523 = vmatprep.mubr.bf16.mxu0 0
        %524 = vmatmul.mubr.bf16.gmra.mrb[0].mxu0 %v486
        %v525 = vpop.f32.mrb[0].mxu0
        %v526 = vadd.f32 0.0, %v525
        %v527 = vpop.f32.mrb[0].mxu0
        %v528 = vpop.f32.mrb[0].mxu0
        %v529 = vpop.f32.mrb[0].mxu0
        %530 = vdwg.mxu0
        %v532 = vsel %vm392, %v387, 0
        %v535 = vsel %vm392, %v391, 0
        %537 = vmatprep.subr.bf16.mxu0 0
        %538 = vmatpush1.bf16.xpose.msra.mxu0 %v535
        %539 = vmatprep.subr.bf16.mxu0 0
        %540 = vmatpush1.bf16.xpose.msra.mxu0 0
        %541 = vmatprep.subr.bf16.mxu0 0
        %542 = vmatpush1.bf16.xpose.msra.mxu0 0
        %543 = vmatprep.subr.bf16.mxu0 0
        %544 = vmatpush1.bf16.xpose.msra.mxu0 0
        %545 = vmatprep.subr.bf16.mxu0 0
        %546 = vmatpush1.bf16.xpose.msra.mxu0 0
        %547 = vmatprep.subr.bf16.mxu0 0
        %548 = vmatpush1.bf16.xpose.msra.mxu0 0
        %549 = vmatprep.subr.bf16.mxu0 0
        %550 = vmatpush1.bf16.xpose.msra.mxu0 0
        %551 = vmatprep.subr.bf16.mxu0 0
        %552 = vmatpush1.bf16.xpose.msra.mxu0 0
        %553 = vmatprep.subr.bf16.mxu0 0
        %554 = vmatpush1.bf16.xpose.msra.mxu0 0
        %555 = vmatprep.subr.bf16.mxu0 0
        %556 = vmatpush1.bf16.xpose.msra.mxu0 0
        %557 = vmatprep.subr.bf16.mxu0 0
        %558 = vmatpush1.bf16.xpose.msra.mxu0 0
        %559 = vmatprep.subr.bf16.mxu0 0
        %560 = vmatpush1.bf16.xpose.msra.mxu0 0
        %561 = vmatprep.subr.bf16.mxu0 0
        %562 = vmatpush1.bf16.xpose.msra.mxu0 0
        %563 = vmatprep.subr.bf16.mxu0 0
        %564 = vmatpush1.bf16.xpose.msra.mxu0 0
        %565 = vmatprep.subr.bf16.mxu0 0
        %566 = vmatpush1.bf16.xpose.msra.mxu0 0
        %567 = vmatprep.subr.bf16.mxu0 0
        %568 = vmatpush1.bf16.xpose.msra.mxu0 0
        %569 = vmatprep.mubr.bf16.mxu0 0
        %570 = vmatmul.mubr.bf16.gmra.mrb[0].mxu0 %v532
        %v571 = vpop.f32.mrb[0].mxu0
        %v572 = vadd.f32 0.0, %v571
        %v573 = vpop.f32.mrb[0].mxu0
        %v574 = vpop.f32.mrb[0].mxu0
        %v575 = vpop.f32.mrb[0].mxu0
        %576 = vdwg.mxu0
        %v577 = vld [vmem:[#allocation2] sm:$0xff]
        %v578 = vld [vmem:[#allocation2 + $0x8] sm:$0xff]
        %v579 = vld [vmem:[#allocation2 + $0x10] sm:$0xff]
        %v580 = vld [vmem:[#allocation2 + $0x18] sm:$0xff]
        %v581 = vsel %vm392, %v434, -inf
        %582 = vmax.xlane.f32.xlu0 %v581
        %v583 = vpop.xlane.xlu0 %582
        %v584 = vsel %vm392, %v480, -inf
        %585 = vmax.xlane.f32.xlu0 %v584
        %v586 = vpop.xlane.xlu0 %585
        %v587 = vsel %vm392, %v526, -inf
        %588 = vmax.xlane.f32.xlu0 %v587
        %v589 = vpop.xlane.xlu0 %588
        %v590 = vsel %vm392, %v572, -inf
        %591 = vmax.xlane.f32.xlu0 %v590
        %v592 = vpop.xlane.xlu0 %591
        %v593 = vmax.f32 %v577, %v583
        %v594 = vmax.f32 %v578, %v586
        %v595 = vmax.f32 %v579, %v589
        %v596 = vmax.f32 %v580, %v592
        %v597 = vsub.f32 %v577, %v593
        %v598 = vsub.f32 %v578, %v594
        %v599 = vsub.f32 %v579, %v595
        %v600 = vsub.f32 %v580, %v596
        %v601 = vmul.f32 %v597, 1.442695
        %v602 = vpow.pop %v601
        %v603 = vmul.f32 %v598, 1.442695
        %v604 = vpow.pop %v603
        %v605 = vmul.f32 %v599, 1.442695
        %v606 = vpow.pop %v605
        %v607 = vmul.f32 %v600, 1.442695
        %v608 = vpow.pop %v607
        %610 = vset.pattern.permute.xlu0 0
        %611 = vperm.xlu0 %610, %v593
        %v612 = vpop.permute.xlu0 %611
        %615 = vset.pattern.permute.xlu0 0
        %616 = vperm.xlu0 %615, %v594
        %v617 = vpop.permute.xlu0 %616
        %620 = vset.pattern.permute.xlu0 0
        %621 = vperm.xlu0 %620, %v595
        %v622 = vpop.permute.xlu0 %621
        %625 = vset.pattern.permute.xlu0 0
        %626 = vperm.xlu0 %625, %v596
        %v627 = vpop.permute.xlu0 %626
        %v629 = vsub.f32 %v434, %v612
        %v630 = vsub.f32 %v480, %v617
        %v631 = vsub.f32 %v526, %v622
        %v632 = vsub.f32 %v572, %v627
        %v633 = vmul.f32 %v629, 1.442695
        %v634 = vpow.pop %v633
        %v635 = vmul.f32 %v630, 1.442695
        %v636 = vpow.pop %v635
        %v637 = vmul.f32 %v631, 1.442695
        %v638 = vpow.pop %v637
        %v639 = vmul.f32 %v632, 1.442695
        %v640 = vpow.pop %v639
        %v641 = vld [vmem:[#allocation3] sm:$0xff]
        %v642 = vld [vmem:[#allocation3 + $0x8] sm:$0xff]
        %v643 = vld [vmem:[#allocation3 + $0x10] sm:$0xff]
        %v644 = vld [vmem:[#allocation3 + $0x18] sm:$0xff]
        %v645 = vmul.f32 %v602, %v641
        %v646 = vmul.f32 %v604, %v642
        %v647 = vmul.f32 %v606, %v643
        %v648 = vmul.f32 %v608, %v644
        %v649 = vsel %vm392, %v634, 0.0
        %650 = vadd.xlane.f32.xlu0 %v649
        %v651 = vpop.xlane.xlu0 %650
        %v652 = vsel %vm392, %v636, 0.0
        %653 = vadd.xlane.f32.xlu0 %v652
        %v654 = vpop.xlane.xlu0 %653
        %v655 = vsel %vm392, %v638, 0.0
        %656 = vadd.xlane.f32.xlu0 %v655
        %v657 = vpop.xlane.xlu0 %656
        %v658 = vsel %vm392, %v640, 0.0
        %659 = vadd.xlane.f32.xlu0 %v658
        %v660 = vpop.xlane.xlu0 %659
        %v661 = vadd.f32 %v645, %v651
        %v662 = vadd.f32 %v646, %v654
        %v663 = vadd.f32 %v647, %v657
        %v664 = vadd.f32 %v648, %v660
        %vm665 = vcmask 7168
        %666 = vst.msk [vmem:[#allocation3] sm:$0xff] %vm665, %v661
        %667 = vst.msk [vmem:[#allocation3 + $0x8] sm:$0xff] %vm665, %v662
        %668 = vst.msk [vmem:[#allocation3 + $0x10] sm:$0xff] %vm665, %v663
        %669 = vst.msk [vmem:[#allocation3 + $0x18] sm:$0xff] %vm665, %v664
        %v670 = vld [vmem:[#allocation4] sm:$0xff]
        %v671 = vld [vmem:[#allocation4 + $0x8] sm:$0xff]
        %v672 = vld [vmem:[#allocation4 + $0x10] sm:$0xff]
        %v673 = vld [vmem:[#allocation4 + $0x18] sm:$0xff]
        %675 = vset.pattern.permute.xlu0 0
        %676 = vperm.xlu0 %675, %v602
        %v677 = vpop.permute.xlu0 %676
        %680 = vset.pattern.permute.xlu0 0
        %681 = vperm.xlu0 %680, %v604
        %v682 = vpop.permute.xlu0 %681
        %685 = vset.pattern.permute.xlu0 0
        %686 = vperm.xlu0 %685, %v606
        %v687 = vpop.permute.xlu0 %686
        %690 = vset.pattern.permute.xlu0 0
        %691 = vperm.xlu0 %690, %v608
        %v692 = vpop.permute.xlu0 %691
        %v694 = vmul.f32 %v677, %v670
        %v695 = vmul.f32 %v682, %v671
        %v696 = vmul.f32 %v687, %v672
        %v697 = vmul.f32 %v692, %v673
        %v698 = vpack.c.bf16 %v634, %v634
        %v699 = vpack.c.bf16 %v636, %v636
        %v700 = vpack.c.bf16 %v638, %v638
        %v701 = vpack.c.bf16 %v640, %v640
        %v702 = vld [vmem:[%s324] sm:$0xf]
        %v703 = vld [vmem:[%s324 + $0x4] sm:$0xf]
        %v704 = vld [vmem:[%s324 + $0x8] sm:$0xf]
        %v705 = vld [vmem:[%s324 + $0xc] sm:$0xf]
        %v707 = vsel %vm392, %v698, 0
        %vm709 = vcmask 1043456
        %v711 = vsel %vm709, %v702, 0
        %713 = vmatprep.subr.bf16.mxu0 0
        %714 = vmatpush1.bf16.msra.mxu0 %v711
        %715 = vmatprep.subr.bf16.mxu0 0
        %716 = vmatpush1.bf16.msra.mxu0 0
        %717 = vmatprep.subr.bf16.mxu0 0
        %718 = vmatpush1.bf16.msra.mxu0 0
        %719 = vmatprep.subr.bf16.mxu0 0
        %720 = vmatpush1.bf16.msra.mxu0 0
        %721 = vmatprep.subr.bf16.mxu0 0
        %722 = vmatpush1.bf16.msra.mxu0 0
        %723 = vmatprep.subr.bf16.mxu0 0
        %724 = vmatpush1.bf16.msra.mxu0 0
        %725 = vmatprep.subr.bf16.mxu0 0
        %726 = vmatpush1.bf16.msra.mxu0 0
        %727 = vmatprep.subr.bf16.mxu0 0
        %728 = vmatpush1.bf16.msra.mxu0 0
        %729 = vmatprep.subr.bf16.mxu0 0
        %730 = vmatpush1.bf16.msra.mxu0 0
        %731 = vmatprep.subr.bf16.mxu0 0
        %732 = vmatpush1.bf16.msra.mxu0 0
        %733 = vmatprep.subr.bf16.mxu0 0
        %734 = vmatpush1.bf16.msra.mxu0 0
        %735 = vmatprep.subr.bf16.mxu0 0
        %736 = vmatpush1.bf16.msra.mxu0 0
        %737 = vmatprep.subr.bf16.mxu0 0
        %738 = vmatpush1.bf16.msra.mxu0 0
        %739 = vmatprep.subr.bf16.mxu0 0
        %740 = vmatpush1.bf16.msra.mxu0 0
        %741 = vmatprep.subr.bf16.mxu0 0
        %742 = vmatpush1.bf16.msra.mxu0 0
        %743 = vmatprep.subr.bf16.mxu0 0
        %744 = vmatpush1.bf16.msra.mxu0 0
        %745 = vmatprep.mubr.bf16.mxu0 0
        %746 = vmatmul.mubr.bf16.gmra.mrb[0].mxu0 %v707
        %v747 = vpop.f32.mrb[0].mxu0
        %v748 = vadd.f32 0.0, %v747
        %v749 = vpop.f32.mrb[0].mxu0
        %v750 = vpop.f32.mrb[0].mxu0
        %v751 = vpop.f32.mrb[0].mxu0
        %752 = vdwg.mxu0
        %v754 = vsel %vm392, %v699, 0
        %v757 = vsel %vm709, %v703, 0
        %759 = vmatprep.subr.bf16.mxu0 0
        %760 = vmatpush1.bf16.msra.mxu0 %v757
        %761 = vmatprep.subr.bf16.mxu0 0
        %762 = vmatpush1.bf16.msra.mxu0 0
        %763 = vmatprep.subr.bf16.mxu0 0
        %764 = vmatpush1.bf16.msra.mxu0 0
        %765 = vmatprep.subr.bf16.mxu0 0
        %766 = vmatpush1.bf16.msra.mxu0 0
        %767 = vmatprep.subr.bf16.mxu0 0
        %768 = vmatpush1.bf16.msra.mxu0 0
        %769 = vmatprep.subr.bf16.mxu0 0
        %770 = vmatpush1.bf16.msra.mxu0 0
        %771 = vmatprep.subr.bf16.mxu0 0
        %772 = vmatpush1.bf16.msra.mxu0 0
        %773 = vmatprep.subr.bf16.mxu0 0
        %774 = vmatpush1.bf16.msra.mxu0 0
        %775 = vmatprep.subr.bf16.mxu0 0
        %776 = vmatpush1.bf16.msra.mxu0 0
        %777 = vmatprep.subr.bf16.mxu0 0
        %778 = vmatpush1.bf16.msra.mxu0 0
        %779 = vmatprep.subr.bf16.mxu0 0
        %780 = vmatpush1.bf16.msra.mxu0 0
        %781 = vmatprep.subr.bf16.mxu0 0
        %782 = vmatpush1.bf16.msra.mxu0 0
        %783 = vmatprep.subr.bf16.mxu0 0
        %784 = vmatpush1.bf16.msra.mxu0 0
        %785 = vmatprep.subr.bf16.mxu0 0
        %786 = vmatpush1.bf16.msra.mxu0 0
        %787 = vmatprep.subr.bf16.mxu0 0
        %788 = vmatpush1.bf16.msra.mxu0 0
        %789 = vmatprep.subr.bf16.mxu0 0
        %790 = vmatpush1.bf16.msra.mxu0 0
        %791 = vmatprep.mubr.bf16.mxu0 0
        %792 = vmatmul.mubr.bf16.gmra.mrb[0].mxu0 %v754
        %v793 = vpop.f32.mrb[0].mxu0
        %v794 = vadd.f32 0.0, %v793
        %v795 = vpop.f32.mrb[0].mxu0
        %v796 = vpop.f32.mrb[0].mxu0
        %v797 = vpop.f32.mrb[0].mxu0
        %798 = vdwg.mxu0
        %v800 = vsel %vm392, %v700, 0
        %v803 = vsel %vm709, %v704, 0
        %805 = vmatprep.subr.bf16.mxu0 0
        %806 = vmatpush1.bf16.msra.mxu0 %v803
        %807 = vmatprep.subr.bf16.mxu0 0
        %808 = vmatpush1.bf16.msra.mxu0 0
        %809 = vmatprep.subr.bf16.mxu0 0
        %810 = vmatpush1.bf16.msra.mxu0 0
        %811 = vmatprep.subr.bf16.mxu0 0
        %812 = vmatpush1.bf16.msra.mxu0 0
        %813 = vmatprep.subr.bf16.mxu0 0
        %814 = vmatpush1.bf16.msra.mxu0 0
        %815 = vmatprep.subr.bf16.mxu0 0
        %816 = vmatpush1.bf16.msra.mxu0 0
        %817 = vmatprep.subr.bf16.mxu0 0
        %818 = vmatpush1.bf16.msra.mxu0 0
        %819 = vmatprep.subr.bf16.mxu0 0
        %820 = vmatpush1.bf16.msra.mxu0 0
        %821 = vmatprep.subr.bf16.mxu0 0
        %822 = vmatpush1.bf16.msra.mxu0 0
        %823 = vmatprep.subr.bf16.mxu0 0
        %824 = vmatpush1.bf16.msra.mxu0 0
        %825 = vmatprep.subr.bf16.mxu0 0
        %826 = vmatpush1.bf16.msra.mxu0 0
        %827 = vmatprep.subr.bf16.mxu0 0
        %828 = vmatpush1.bf16.msra.mxu0 0
        %829 = vmatprep.subr.bf16.mxu0 0
        %830 = vmatpush1.bf16.msra.mxu0 0
        %831 = vmatprep.subr.bf16.mxu0 0
        %832 = vmatpush1.bf16.msra.mxu0 0
        %833 = vmatprep.subr.bf16.mxu0 0
        %834 = vmatpush1.bf16.msra.mxu0 0
        %835 = vmatprep.subr.bf16.mxu0 0
        %836 = vmatpush1.bf16.msra.mxu0 0
        %837 = vmatprep.mubr.bf16.mxu0 0
        %838 = vmatmul.mubr.bf16.gmra.mrb[0].mxu0 %v800
        %v839 = vpop.f32.mrb[0].mxu0
        %v840 = vadd.f32 0.0, %v839
        %v841 = vpop.f32.mrb[0].mxu0
        %v842 = vpop.f32.mrb[0].mxu0
        %v843 = vpop.f32.mrb[0].mxu0
        %844 = vdwg.mxu0
        %v846 = vsel %vm392, %v701, 0
        %v849 = vsel %vm709, %v705, 0
        %851 = vmatprep.subr.bf16.mxu0 0
        %852 = vmatpush1.bf16.msra.mxu0 %v849
        %853 = vmatprep.subr.bf16.mxu0 0
        %854 = vmatpush1.bf16.msra.mxu0 0
        %855 = vmatprep.subr.bf16.mxu0 0
        %856 = vmatpush1.bf16.msra.mxu0 0
        %857 = vmatprep.subr.bf16.mxu0 0
        %858 = vmatpush1.bf16.msra.mxu0 0
        %859 = vmatprep.subr.bf16.mxu0 0
        %860 = vmatpush1.bf16.msra.mxu0 0
        %861 = vmatprep.subr.bf16.mxu0 0
        %862 = vmatpush1.bf16.msra.mxu0 0
        %863 = vmatprep.subr.bf16.mxu0 0
        %864 = vmatpush1.bf16.msra.mxu0 0
        %865 = vmatprep.subr.bf16.mxu0 0
        %866 = vmatpush1.bf16.msra.mxu0 0
        %867 = vmatprep.subr.bf16.mxu0 0
        %868 = vmatpush1.bf16.msra.mxu0 0
        %869 = vmatprep.subr.bf16.mxu0 0
        %870 = vmatpush1.bf16.msra.mxu0 0
        %871 = vmatprep.subr.bf16.mxu0 0
        %872 = vmatpush1.bf16.msra.mxu0 0
        %873 = vmatprep.subr.bf16.mxu0 0
        %874 = vmatpush1.bf16.msra.mxu0 0
        %875 = vmatprep.subr.bf16.mxu0 0
        %876 = vmatpush1.bf16.msra.mxu0 0
        %877 = vmatprep.subr.bf16.mxu0 0
        %878 = vmatpush1.bf16.msra.mxu0 0
        %879 = vmatprep.subr.bf16.mxu0 0
        %880 = vmatpush1.bf16.msra.mxu0 0
        %881 = vmatprep.subr.bf16.mxu0 0
        %882 = vmatpush1.bf16.msra.mxu0 0
        %883 = vmatprep.mubr.bf16.mxu0 0
        %884 = vmatmul.mubr.bf16.gmra.mrb[0].mxu0 %v846
        %v885 = vpop.f32.mrb[0].mxu0
        %v886 = vadd.f32 0.0, %v885
        %v887 = vpop.f32.mrb[0].mxu0
        %v888 = vpop.f32.mrb[0].mxu0
        %v889 = vpop.f32.mrb[0].mxu0
        %890 = vdwg.mxu0
        %v891 = vadd.f32 %v694, %v748
        %v892 = vadd.f32 %v695, %v794
        %v893 = vadd.f32 %v696, %v840
        %v894 = vadd.f32 %v697, %v886
        %895 = vst.msk [vmem:[#allocation4] sm:$0xff] %vm392, %v891
        %896 = vst.msk [vmem:[#allocation4 + $0x8] sm:$0xff] %vm392, %v892
        %897 = vst.msk [vmem:[#allocation4 + $0x10] sm:$0xff] %vm392, %v893
        %898 = vst.msk [vmem:[#allocation4 + $0x18] sm:$0xff] %vm392, %v894
        %899 = vst.msk [vmem:[#allocation2] sm:$0xff] %vm665, %v593
        %900 = vst.msk [vmem:[#allocation2 + $0x8] sm:$0xff] %vm665, %v594
        %901 = vst.msk [vmem:[#allocation2 + $0x10] sm:$0xff] %vm665, %v595
        %902 = vst.msk [vmem:[#allocation2 + $0x18] sm:$0xff] %vm665, %v596
        // Predicated region
        $region61: #{tpu_custom_call.1} parent=39 // pred_check
          %p903 = pneg %p366
        $region62: #{tpu_custom_call.1} parent=39 // pred_check_branch
          %905 = sbr.rel (%p903) target = $region64
        $region63: #{tpu_custom_call.1} parent=39 // pred_region
          %v906 = vld [vmem:[#allocation3] sm:$0xff]
          %v907 = vld [vmem:[#allocation3 + $0x8] sm:$0xff]
          %v908 = vld [vmem:[#allocation3 + $0x10] sm:$0xff]
          %v909 = vld [vmem:[#allocation3 + $0x18] sm:$0xff]
          %v910 = vrcp.pop %v906
          %v911 = vrcp.pop %v907
          %v912 = vrcp.pop %v908
          %v913 = vrcp.pop %v909
          %v914 = vld [vmem:[#allocation4] sm:$0xff]
          %916 = vset.pattern.permute.xlu0 0
          %917 = vperm.xlu0 %916, %v910
          %v918 = vpop.permute.xlu0 %917
          %v920 = vmul.f32 %v914, %v918
          %v921 = vpack.c.bf16 %v920, %v920
          %vm922 = vcmask 60416
          %923 = vst.msk [vmem:[#allocation5] sm:$0xf] %vm922, %v921
          %s924 = scalar_lea.vmem [#allocation4], 8
          %v925 = vld [vmem:[%s924] sm:$0xff]
          %927 = vset.pattern.permute.xlu0 0
          %928 = vperm.xlu0 %927, %v911
          %v929 = vpop.permute.xlu0 %928
          %v931 = vmul.f32 %v925, %v929
          %v932 = vpack.c.bf16 %v931, %v931
          %v934 = vunpack.c.l.b16 %v932
          %v935 = vpack.c.b16 %v934, %v934
          %936 = vrot.lane.b32.xlu0 %v935, 8
          %v937 = vpop.permute.xlu0 %936
          %vm939 = vcmask 126016
          %940 = vst.msk [vmem:[#allocation5] sm:$0xf] %vm939, %v937
          %s941 = scalar_lea.vmem [#allocation4], 16
          %v942 = vld [vmem:[%s941] sm:$0xff]
          %944 = vset.pattern.permute.xlu0 0
          %945 = vperm.xlu0 %944, %v912
          %v946 = vpop.permute.xlu0 %945
          %v948 = vmul.f32 %v942, %v946
          %v949 = vpack.c.bf16 %v948, %v948
          %v951 = vunpack.c.l.b16 %v949
          %v952 = vpack.c.b16 %v951, %v951
          %953 = vrot.lane.b32.xlu0 %v952, 16
          %v954 = vpop.permute.xlu0 %953
          %vm956 = vcmask 191616
          %957 = vst.msk [vmem:[#allocation5] sm:$0xf] %vm956, %v954
          %s958 = scalar_lea.vmem [#allocation4], 24
          %v959 = vld [vmem:[%s958] sm:$0xff]
          %961 = vset.pattern.permute.xlu0 0
          %962 = vperm.xlu0 %961, %v913
          %v963 = vpop.permute.xlu0 %962
          %v965 = vmul.f32 %v959, %v963
          %v966 = vpack.c.bf16 %v965, %v965
          %v968 = vunpack.c.l.b16 %v966
          %v969 = vpack.c.b16 %v968, %v968
          %970 = vrot.lane.b32.xlu0 %v969, 24
          %v971 = vpop.permute.xlu0 %970
          %vm973 = vcmask 257216
          %974 = vst.msk [vmem:[#allocation5] sm:$0xf] %vm973, %v971
          %v975 = vld [vmem:[#allocation5] sm:$0xf]
          %v976 = vld [vmem:[#allocation12] sm:$0xf]
          %v977 = vld [vmem:[#allocation12 + $0x4] sm:$0xf]
          %v978 = vld [vmem:[#allocation12 + $0x8] sm:$0xf]
          %v979 = vld [vmem:[#allocation12 + $0xc] sm:$0xf]
          %v980 = vld [vmem:[%s4] sm:$0x1]
          %v982 = vlaneseq
          %v983 = vshrl.u32 %v982, 7
          %v984 = vsub.s32 0, %v983
          %v985 = vrot.slane %v980, %v984
          %v991 = vunpack.c.l.b16 %v976
          %v992 = vunpack.c.l.b16 %v977
          %v993 = vunpack.c.l.b16 %v978
          %v994 = vunpack.c.l.b16 %v979
          %v995 = vpack.c.b16 %v992, %v991
          %v996 = vpack.c.b16 %v994, %v993
          %vm999 = vcmask 261120
          %v1001 = vsel %vm999, %v975, 0
          %1003 = vmatprep.subr.bf16.mxu0 0
          %1004 = vmatpush1.bf16.msra.mxu0 %v995
          %1005 = vmatprep.subr.bf16.mxu0 0
          %1006 = vmatpush1.bf16.msra.mxu0 %v996
          %1007 = vmatprep.subr.bf16.mxu0 0
          %1008 = vmatpush1.bf16.msra.mxu0 0
          %1009 = vmatprep.subr.bf16.mxu0 0
          %1010 = vmatpush1.bf16.msra.mxu0 0
          %1011 = vmatprep.subr.bf16.mxu0 0
          %1012 = vmatpush1.bf16.msra.mxu0 0
          %1013 = vmatprep.subr.bf16.mxu0 0
          %1014 = vmatpush1.bf16.msra.mxu0 0
          %1015 = vmatprep.subr.bf16.mxu0 0
          %1016 = vmatpush1.bf16.msra.mxu0 0
          %1017 = vmatprep.subr.bf16.mxu0 0
          %1018 = vmatpush1.bf16.msra.mxu0 0
          %1019 = vmatprep.subr.bf16.mxu0 0
          %1020 = vmatpush1.bf16.msra.mxu0 0
          %1021 = vmatprep.subr.bf16.mxu0 0
          %1022 = vmatpush1.bf16.msra.mxu0 0
          %1023 = vmatprep.subr.bf16.mxu0 0
          %1024 = vmatpush1.bf16.msra.mxu0 0
          %1025 = vmatprep.subr.bf16.mxu0 0
          %1026 = vmatpush1.bf16.msra.mxu0 0
          %1027 = vmatprep.subr.bf16.mxu0 0
          %1028 = vmatpush1.bf16.msra.mxu0 0
          %1029 = vmatprep.subr.bf16.mxu0 0
          %1030 = vmatpush1.bf16.msra.mxu0 0
          %1031 = vmatprep.subr.bf16.mxu0 0
          %1032 = vmatpush1.bf16.msra.mxu0 0
          %1033 = vmatprep.subr.bf16.mxu0 0
          %1034 = vmatpush1.bf16.msra.mxu0 0
          %1035 = vmatprep.mubr.bf16.mxu0 0
          %1036 = vmatmul.mubr.bf16.gmra.mrb[0].mxu0 %v1001
          %v1037 = vpop.f32.mrb[0].mxu0
          %v1038 = vadd.f32 %v985, %v1037
          %v1039 = vpop.f32.mrb[0].mxu0
          %v1040 = vpop.f32.mrb[0].mxu0
          %v1041 = vpop.f32.mrb[0].mxu0
          %1042 = vdwg.mxu0
          %1043 = vst.msk [vmem:[%s364] sm:$0xff] %vm999, %v1038
        $region64: #{tpu_custom_call.1} parent=39 // pred_fallthru
          _
        %s1044 = sand.u32 %s181, 1
        %s1045 = scalar_lea.sflag [#allocation8], %s1044
        %s1046 = sand.u32 %s181, 1
        %s1047 = smul.addr %s1046, 8
        %s1048 = scalar_lea.vmem [#allocation14], %s1047
        // Predicated region
        $region65: #{tpu_custom_call.1} parent=39 // pred_check
          %p1049 = pneg %p191
        $region66: #{tpu_custom_call.1} parent=39 // pred_check_branch
          %1051 = sbr.rel (%p1049) target = $region68
        $region67: #{tpu_custom_call.1} parent=39 // pred_region
          %s1053 = ssub.s32 128, 128
          %1054 = vsyncadd %s1045, %s1053
          %s1055 = sadd.s32 %s32, %s31
          %s1056 = smul.addr %s1055, 128
          %s1057 = scalar_lea.hbm %s5, %s1056
          %s1059 = sshll.u32 %s1048, 4
          %s1060 = int_to_ptr.vmem [resolvable:$true] %s1059
          %1062 = dma.vmem_to_hbm [thread:$0]  %s1060, 128, %s1057, %s1045
        $region68: #{tpu_custom_call.1} parent=39 // pred_fallthru
          _
      $region40: #{tpu_custom_call.1} parent=5 // pred_fallthru
        _
      %p1063 = scmp.le.s32.totalorder 2, %s21
      // Predicated region
      $region69: #{tpu_custom_call.1} parent=5 // pred_check
        %p1064 = pneg %p1063
      $region70: #{tpu_custom_call.1} parent=5 // pred_check_branch
        %1066 = sbr.rel (%p1064) target = $region72
      $region71: #{tpu_custom_call.1} parent=5 // pred_region
        %s1067 = ssub.s32 %s21, 2
        // Predicated region
        $region73: #{tpu_custom_call.1} parent=71 // pred_check
          %p1068 = pneg %p197
        $region74: #{tpu_custom_call.1} parent=71 // pred_check_branch
          %1070 = sbr.rel (%p1068) target = $region76
        $region75: #{tpu_custom_call.1} parent=71 // pred_region
          %s1071 = sand.u32 %s182, 1
          %s1072 = scalar_lea.sflag [#allocation8], %s1071
          %s1073 = sand.u32 %s182, 1
          %s1074 = smul.addr %s1073, 8
          %s1075 = scalar_lea.vmem [#allocation14], %s1074
          %1076 = dma.done %s1072, 128
        $region76: #{tpu_custom_call.1} parent=71 // pred_fallthru
          _
      $region72: #{tpu_custom_call.1} parent=5 // pred_fallthru
        _
    $region6: #{tpu_custom_call.1} parent=1 // loop_footer
      %s25 = sadd.s32 1, %s21
    $region7: #{tpu_custom_call.1} parent=1 // loop_footer_branch
      %20 = sbr.rel target = $region3
    $region8: #{tpu_custom_call.1} parent=1 // loop_exit
      _
    %1077 = vsyncpa [#allocation7], 1
    %s1078 = scalar_lea.sflag [#allocation7], 1
    %1079 = vsyncpa %s1078, 1
    %1080 = vsyncpa [#allocation10], 1
    %s1081 = scalar_lea.sflag [#allocation10], 1
    %1082 = vsyncpa %s1081, 1
    %1083 = vsyncpa [#allocation13], 1
    %1084 = vsyncpa [#allocation8], 1
    %s1085 = scalar_lea.sflag [#allocation8], 1
    %1086 = vsyncpa %s1085, 1

</llo_original>
